<compile_context>
chip_gen: v5e
topology: v5e:2x2
jax: 0.10.0
libtpu: 0.0.40
codegen_flags: <defaults>
</compile_context>

<pallas_src>
import numpy as np
import jax
import jax.numpy as jnp
from jax.experimental import pallas as pl
from jax.experimental.pallas import tpu as pltpu

CLASSIFICATION_WEIGHT = 1.0
REGRESSION_WEIGHT = 10.0
IGNORE_INDEX = 255

_LANES = 128
_SUBLANES = 8
# Smallest spatial granule: 32 sublanes x 128 lanes = 4096 positions. 32 keeps
# the second-minor block dim a multiple of the native tiling for f32 (8), bf16
# (16) and int8/uint8 (32) inputs alike.
_GRANULE = 32 * _LANES
_MAX_TILE_POSITIONS = 128 * 1024      # review: 64K-256K positions per tile
_TILE_INPUT_BYTES = 8 << 20           # per-tile input bytes (x2 when double-buffered)
_TILE_TEMP_BYTES = 12 << 20           # budget for in-kernel f32 temporaries
_NUM_CORE_SPLITS = 2                  # leading "parallel" axis; sequential no-op on 1-TC chips
_VMEM_LIMIT_BYTES = 48 << 20          # raise scoped VMEM; <= v7x 64 MiB physical
# TODO(synk): on v7x, consider pltpu.CORE_PARALLEL / pl.core_map for the outer
# axis if a profile shows plain "parallel" does not shard across both TCs.


def _round_up(x, m):
    return ((x + m - 1) // m) * m


def _loss_tile_kernel(net_ref, cls_tgt_ref, reg_tgt_ref, out_ref,
                      acc_ce, acc_valid, acc_sl1):
    j = pl.program_id(1)

    @pl.when(j == 0)
    def _init():
        acc_ce[...] = jnp.zeros_like(acc_ce)
        acc_valid[...] = jnp.zeros_like(acc_valid)
        acc_sl1[...] = jnp.zeros_like(acc_sl1)

    # Targets stream in their narrow integer dtype; upcast in-kernel (VPU unpack).
    tgt = cls_tgt_ref[...].astype(jnp.int32)          # (S, 128) in {0, 1, 255}
    valid = tgt != IGNORE_INDEX
    keep_reg = tgt != 0
    t = (tgt == 1).astype(jnp.float32)

    # 2-class CE == binary CE with logit z = a1 - a0 (stable softplus form):
    #   ce = max(z, 0) - t*z + log1p(exp(-|z|))
    a0 = net_ref[0].astype(jnp.float32)               # (S, 128)
    a1 = net_ref[1].astype(jnp.float32)
    z = a1 - a0
    ce = jnp.maximum(z, 0.0) - t * z + jnp.log1p(jnp.exp(-jnp.abs(z)))
    ce = jnp.where(valid, ce, 0.0)

    # Partial-reduce the tile onto fixed (8,128) accumulators (layout-preserving
    # reshapes: S is a multiple of 8, so these are pure vreg-wise VALU adds).
    acc_ce[...] += jnp.sum(ce.reshape(-1, _SUBLANES, _LANES), axis=0)
    acc_valid[...] += jnp.sum(
        valid.astype(jnp.float32).reshape(-1, _SUBLANES, _LANES), axis=0)

    # SmoothL1 (beta=1, reduction='none'), zeroed where classification target == 0.
    r = reg_tgt_ref.shape[0]
    reg_pred = net_ref[pl.ds(2, r), :, :].astype(jnp.float32)   # (R, S, 128)
    d = reg_pred - reg_tgt_ref[...].astype(jnp.float32)
    ad = jnp.abs(d)
    sl1 = jnp.where(ad < 1.0, 0.5 * d * d, ad - 0.5)
    sl1 = jnp.where(keep_reg[None, :, :], sl1, 0.0)
    acc_sl1[...] += jnp.sum(sl1.reshape(-1, _SUBLANES, _LANES), axis=0)

    # Write the tiny per-core partial sums exactly once.
    @pl.when(j == pl.num_programs(1) - 1)
    def _finalize():
        out_ref[0, 0, :, :] = acc_ce[...]
        out_ref[0, 1, :, :] = acc_valid[...]
        out_ref[0, 2, :, :] = acc_sl1[...]


def box_tracking_loss(network_output, classification_targets, regression_targets,
                      *, tile_positions=None):
    """network_output: [1, 2+R, H, W]; classification_targets: [H, W] int;
    regression_targets: [R, H, W]. Returns scalar f32 loss."""
    N, C, H, W = network_output.shape
    assert N == 1, "module semantics use batch dim 1 (targets are unsqueeze(0)'d)"
    R = C - 2
    assert R >= 1, "expect at least one regression channel"
    P = H * W
    n_split = _NUM_CORE_SPLITS

    # --- Flatten (free reshapes; no dtype cast of the big tensors). ----------
    net = network_output.reshape(C, P)
    reg_tgt = regression_targets.reshape(R, P)
    cls_tgt = classification_targets.reshape(P)
    # Targets must be an integer type that holds 255 exactly; keep narrow dtypes
    # (uint8/int16/int32) as-is so the HBM stream stays small.
    if (not jnp.issubdtype(cls_tgt.dtype, jnp.integer)
            or cls_tgt.dtype == jnp.dtype('int8')
            or cls_tgt.dtype.itemsize > 4):
        cls_tgt = cls_tgt.astype(jnp.int32)

    bytes_per_pos = (C * net.dtype.itemsize + cls_tgt.dtype.itemsize
                     + R * reg_tgt.dtype.itemsize)

    # --- Tile selection (multiple of _GRANULE positions). --------------------
    per_split_cap = _round_up(-(-P // n_split), _GRANULE)
    if tile_positions is None:
        tp = min(_MAX_TILE_POSITIONS,
                 _TILE_INPUT_BYTES // bytes_per_pos,
                 _TILE_TEMP_BYTES // ((R + 2) * 4))
    else:
        tp = tile_positions
    tp = max(_GRANULE, (min(tp, per_split_cap) // _GRANULE) * _GRANULE)
    S = tp // _LANES                                   # sublane rows per tile

    # --- Pad P so it divides evenly into (n_split, tiles). -------------------
    # cls pads with 255 (ignored by CE, doesn't touch n_valid); net/reg pad
    # with 0 so d = 0 => SmoothL1 = 0. Denominators stay the ORIGINAL P.
    P_pad = _round_up(P, n_split * tp)
    pad = P_pad - P
    if pad:
        net = jnp.pad(net, ((0, 0), (0, pad)))
        reg_tgt = jnp.pad(reg_tgt, ((0, 0), (0, pad)))
        cls_tgt = jnp.pad(cls_tgt, ((0, pad),), constant_values=IGNORE_INDEX)

    rows = P_pad // _LANES
    net = net.reshape(C, rows, _LANES)                 # spatial fills (sublane, lane)
    reg_tgt = reg_tgt.reshape(R, rows, _LANES)
    cls_tgt = cls_tgt.reshape(rows, _LANES)

    tiles_per = P_pad // (n_split * tp)

    def blk(i, j):
        return i * tiles_per + j

    cost = pl.CostEstimate(
        flops=12 * (R + 2) * P_pad,
        transcendentals=2 * P_pad,
        bytes_accessed=int(net.size * net.dtype.itemsize
                           + cls_tgt.size * cls_tgt.dtype.itemsize
                           + reg_tgt.size * reg_tgt.dtype.itemsize
                           + n_split * 3 * _SUBLANES * _LANES * 4),
    )

    partials = pl.pallas_call(
        _loss_tile_kernel,
        out_shape=jax.ShapeDtypeStruct((n_split, 3, _SUBLANES, _LANES), jnp.float32),
        grid_spec=pltpu.PrefetchScalarGridSpec(
            num_scalar_prefetch=0,
            grid=(n_split, tiles_per),
            in_specs=[
                pl.BlockSpec((C, S, _LANES), lambda i, j: (0, blk(i, j), 0)),
                pl.BlockSpec((S, _LANES), lambda i, j: (blk(i, j), 0)),
                pl.BlockSpec((R, S, _LANES), lambda i, j: (0, blk(i, j), 0)),
            ],
            out_specs=pl.BlockSpec((1, 3, _SUBLANES, _LANES),
                                   lambda i, j: (i, 0, 0, 0)),
            scratch_shapes=[
                pltpu.VMEM((_SUBLANES, _LANES), jnp.float32),   # acc_ce
                pltpu.VMEM((_SUBLANES, _LANES), jnp.float32),   # acc_valid
                pltpu.VMEM((_SUBLANES, _LANES), jnp.float32),   # acc_sl1
            ],
        ),
        compiler_params=pltpu.CompilerParams(
            dimension_semantics=("parallel", "arbitrary"),
            vmem_limit_bytes=_VMEM_LIMIT_BYTES,
        ),
        cost_estimate=cost,
    )(net, cls_tgt, reg_tgt)

    # Tiny final cross-lane / cross-core combine (n_split * 3 * 8 * 128 floats).
    sum_ce = jnp.sum(partials[:, 0])
    n_valid = jnp.sum(partials[:, 1])
    sum_sl1 = jnp.sum(partials[:, 2])
    ce_loss = sum_ce / n_valid                 # NaN if all positions ignored (matches PyTorch)
    reg_mean = sum_sl1 / jnp.float32(R * P)    # mean over ORIGINAL R*H*W
    return CLASSIFICATION_WEIGHT * ce_loss + REGRESSION_WEIGHT * reg_mean


def _reference(network_output, classification_targets, regression_targets):
    """Pure-JAX reference mirroring the PyTorch forward."""
    cls_pred = network_output[:, :2]                       # [1, 2, H, W]
    reg_pred = network_output[:, 2:]                       # [1, R, H, W]
    tgt = classification_targets[None].astype(jnp.int32)   # [1, H, W]
    reg_tgt = regression_targets[None]                     # [1, R, H, W]

    logp = jax.nn.log_softmax(cls_pred.astype(jnp.float32), axis=1)
    sel = jnp.where(tgt == 1, logp[:, 1], logp[:, 0])
    valid = tgt != IGNORE_INDEX
    ce = -jnp.sum(jnp.where(valid, sel, 0.0)) / jnp.sum(valid)

    d = reg_pred.astype(jnp.float32) - reg_tgt.astype(jnp.float32)
    ad = jnp.abs(d)
    sl1 = jnp.where(ad < 1.0, 0.5 * d * d, ad - 0.5)
    sl1 = jnp.where(tgt[:, None] == 0, 0.0, sl1)
    return CLASSIFICATION_WEIGHT * ce + REGRESSION_WEIGHT * jnp.mean(sl1)


if __name__ == "__main__":
    key = jax.random.PRNGKey(0)
    k1, k2, k3, k4, k5, k6 = jax.random.split(key, 6)

    # Case 1: evenly shaped input, explicit small tile so the kernel exercises a
    # multi-step (2, 2) grid (2-way core split x 2-step spatial reduction),
    # byte-sized classification targets.
    H, W, R = 128, 128, 4
    net1 = jax.random.normal(k1, (1, 2 + R, H, W), dtype=jnp.float32)
    cls1 = jax.random.randint(k2, (H, W), 0, 2, dtype=jnp.int32).astype(jnp.uint8)
    cls1 = cls1.at[0, :7].set(IGNORE_INDEX)          # exercise ignore_index=255
    reg1 = jax.random.normal(k3, (R, H, W), dtype=jnp.float32)

    out1 = jax.block_until_ready(
        box_tracking_loss(net1, cls1, reg1, tile_positions=4096))
    ref1 = jax.block_until_ready(_reference(net1, cls1, reg1))
    assert np.allclose(np.asarray(out1), np.asarray(ref1),
                       rtol=1e-4, atol=1e-5), (out1, ref1)

    # Case 2: awkward H*W exercising the padding path + automatic tile sizing.
    H2, W2, R2 = 33, 47, 3
    net2 = jax.random.normal(k4, (1, 2 + R2, H2, W2), dtype=jnp.float32)
    cls2 = jax.random.randint(k5, (H2, W2), 0, 2, dtype=jnp.int32)
    cls2 = cls2.at[3, 5:11].set(IGNORE_INDEX)
    reg2 = jax.random.normal(k6, (R2, H2, W2), dtype=jnp.float32)

    out2 = jax.block_until_ready(box_tracking_loss(net2, cls2, reg2))
    ref2 = jax.block_until_ready(_reference(net2, cls2, reg2))
    assert np.allclose(np.asarray(out2), np.asarray(ref2),
                       rtol=1e-4, atol=1e-5), (out2, ref2)

    print("KERNEL_OK")
</pallas_src>

<mosaic_0001>
module attributes {stable_mosaic.version = 11 : i64} {
  func.func @_loss_tile_kernel(%arg0: i32, %arg1: i32, %arg2: memref<6x32x128xf32, #tpu.memory_space<vmem>>, %arg3: memref<32x128xi8, #tpu.memory_space<vmem>>, %arg4: memref<4x32x128xf32, #tpu.memory_space<vmem>>, %arg5: memref<1x3x8x128xf32, #tpu.memory_space<vmem>>, %arg6: memref<8x128xf32, #tpu.memory_space<vmem>>, %arg7: memref<8x128xf32, #tpu.memory_space<vmem>>, %arg8: memref<8x128xf32, #tpu.memory_space<vmem>>) attributes {dimension_semantics = [#tpu.dimension_semantics<parallel>, #tpu.dimension_semantics<arbitrary>], iteration_bounds = array<i64: 2, 2>, scalar_prefetch = 0 : i64, scratch_operands = 3 : i64, tpu.core_type = #tpu.core_type<tc>, window_params = [{transform_indices = @transform_0, window_bounds = array<i64: 6, 32, 128>}, {transform_indices = @transform_1, window_bounds = array<i64: 32, 128>}, {transform_indices = @transform_2, window_bounds = array<i64: 4, 32, 128>}, {transform_indices = @transform_3, window_bounds = array<i64: 1, 3, 8, 128>}]} {
    %c0_i32 = arith.constant 0 : i32
    %0 = arith.cmpi eq, %arg1, %c0_i32 : i32
    %1 = arith.extui %0 : i1 to i32
    %c0_i32_0 = arith.constant 0 : i32
    %2 = arith.cmpi ne, %1, %c0_i32_0 : i32
    scf.if %2 {
      %cst_36 = arith.constant 0.000000e+00 : f32
      %67 = vector.broadcast %cst_36 : f32 to vector<8x128xf32>
      %c0_37 = arith.constant 0 : index
      %c0_38 = arith.constant 0 : index
      %68 = vector.load %arg6[%c0_37, %c0_38] : memref<8x128xf32, #tpu.memory_space<vmem>>, vector<8x128xf32>
      tpu.vector_store %arg6[%c0_37, %c0_38], %67 {strides = array<i32>} : memref<8x128xf32, #tpu.memory_space<vmem>>, vector<8x128xf32>,
      %cst_39 = arith.constant 0.000000e+00 : f32
      %69 = vector.broadcast %cst_39 : f32 to vector<8x128xf32>
      %c0_40 = arith.constant 0 : index
      %c0_41 = arith.constant 0 : index
      %70 = vector.load %arg7[%c0_40, %c0_41] : memref<8x128xf32, #tpu.memory_space<vmem>>, vector<8x128xf32>
      tpu.vector_store %arg7[%c0_40, %c0_41], %69 {strides = array<i32>} : memref<8x128xf32, #tpu.memory_space<vmem>>, vector<8x128xf32>,
      %cst_42 = arith.constant 0.000000e+00 : f32
      %71 = vector.broadcast %cst_42 : f32 to vector<8x128xf32>
      %c0_43 = arith.constant 0 : index
      %c0_44 = arith.constant 0 : index
      %72 = vector.load %arg8[%c0_43, %c0_44] : memref<8x128xf32, #tpu.memory_space<vmem>>, vector<8x128xf32>
      tpu.vector_store %arg8[%c0_43, %c0_44], %71 {strides = array<i32>} : memref<8x128xf32, #tpu.memory_space<vmem>>, vector<8x128xf32>,
    } else {
    }
    %c0 = arith.constant 0 : index
    %c0_1 = arith.constant 0 : index
    %3 = vector.load %arg3[%c0, %c0_1] : memref<32x128xi8, #tpu.memory_space<vmem>>, vector<32x128xi8>
    %4 = arith.extui %3 : vector<32x128xi8> to vector<32x128xi32>
    %c255_i32 = arith.constant 255 : i32
    %5 = vector.broadcast %c255_i32 : i32 to vector<32x128xi32>
    %6 = arith.cmpi ne, %4, %5 : vector<32x128xi32>
    %c0_i32_2 = arith.constant 0 : i32
    %7 = vector.broadcast %c0_i32_2 : i32 to vector<32x128xi32>
    %8 = arith.cmpi ne, %4, %7 : vector<32x128xi32>
    %c1_i32 = arith.constant 1 : i32
    %9 = vector.broadcast %c1_i32 : i32 to vector<32x128xi32>
    %10 = arith.cmpi eq, %4, %9 : vector<32x128xi32>
    %11 = arith.extui %10 : vector<32x128xi1> to vector<32x128xi32>
    %12 = arith.sitofp %11 : vector<32x128xi32> to vector<32x128xf32>
    %c0_3 = arith.constant 0 : index
    %c0_4 = arith.constant 0 : index
    %c0_5 = arith.constant 0 : index
    %13 = vector.load %arg2[%c0_3, %c0_4, %c0_5] : memref<6x32x128xf32, #tpu.memory_space<vmem>>, vector<1x32x128xf32>
    %14 = vector.shape_cast %13 : vector<1x32x128xf32> to vector<32x128xf32>
    %c1 = arith.constant 1 : index
    %c0_6 = arith.constant 0 : index
    %c0_7 = arith.constant 0 : index
    %15 = vector.load %arg2[%c1, %c0_6, %c0_7] : memref<6x32x128xf32, #tpu.memory_space<vmem>>, vector<1x32x128xf32>
    %16 = vector.shape_cast %15 : vector<1x32x128xf32> to vector<32x128xf32>
    %17 = arith.subf %16, %14 : vector<32x128xf32>
    %cst = arith.constant 0.000000e+00 : f32
    %18 = vector.broadcast %cst : f32 to vector<32x128xf32>
    %19 = arith.maximumf %17, %18 : vector<32x128xf32>
    %20 = arith.mulf %12, %17 : vector<32x128xf32>
    %21 = arith.subf %19, %20 : vector<32x128xf32>
    %22 = math.absf %17 : vector<32x128xf32>
    %cst_8 = arith.constant 0.000000e+00 : f32
    %23 = vector.broadcast %cst_8 : f32 to vector<32x128xf32>
    %24 = arith.subf %23, %22 : vector<32x128xf32>
    %25 = math.exp %24 : vector<32x128xf32>
    %26 = math.log1p %25 : vector<32x128xf32>
    %27 = arith.addf %21, %26 : vector<32x128xf32>
    %cst_9 = arith.constant 0.000000e+00 : f32
    %28 = vector.broadcast %cst_9 : f32 to vector<32x128xf32>
    %29 = arith.select %6, %27, %28 : vector<32x128xi1>, vector<32x128xf32>
    %c0_10 = arith.constant 0 : index
    %c0_11 = arith.constant 0 : index
    %30 = vector.load %arg6[%c0_10, %c0_11] : memref<8x128xf32, #tpu.memory_space<vmem>>, vector<8x128xf32>
    %31 = vector.shape_cast %29 : vector<32x128xf32> to vector<4x8x128xf32>
    %cst_12 = arith.constant dense<0.000000e+00> : vector<8x128xf32>
    %32 = vector.multi_reduction <add>, %31, %cst_12 [0] : vector<4x8x128xf32> to vector<8x128xf32>
    %33 = arith.addf %30, %32 : vector<8x128xf32>
    %c0_13 = arith.constant 0 : index
    %c0_14 = arith.constant 0 : index
    %34 = vector.load %arg6[%c0_13, %c0_14] : memref<8x128xf32, #tpu.memory_space<vmem>>, vector<8x128xf32>
    tpu.vector_store %arg6[%c0_13, %c0_14], %33 {strides = array<i32>} : memref<8x128xf32, #tpu.memory_space<vmem>>, vector<8x128xf32>,
    %c0_15 = arith.constant 0 : index
    %c0_16 = arith.constant 0 : index
    %35 = vector.load %arg7[%c0_15, %c0_16] : memref<8x128xf32, #tpu.memory_space<vmem>>, vector<8x128xf32>
    %36 = arith.extui %6 : vector<32x128xi1> to vector<32x128xi32>
    %37 = arith.sitofp %36 : vector<32x128xi32> to vector<32x128xf32>
    %38 = vector.shape_cast %37 : vector<32x128xf32> to vector<4x8x128xf32>
    %cst_17 = arith.constant dense<0.000000e+00> : vector<8x128xf32>
    %39 = vector.multi_reduction <add>, %38, %cst_17 [0] : vector<4x8x128xf32> to vector<8x128xf32>
    %40 = arith.addf %35, %39 : vector<8x128xf32>
    %c0_18 = arith.constant 0 : index
    %c0_19 = arith.constant 0 : index
    %41 = vector.load %arg7[%c0_18, %c0_19] : memref<8x128xf32, #tpu.memory_space<vmem>>, vector<8x128xf32>
    tpu.vector_store %arg7[%c0_18, %c0_19], %40 {strides = array<i32>} : memref<8x128xf32, #tpu.memory_space<vmem>>, vector<8x128xf32>,
    %c2 = arith.constant 2 : index
    %c0_20 = arith.constant 0 : index
    %c0_21 = arith.constant 0 : index
    %42 = vector.load %arg2[%c2, %c0_20, %c0_21] : memref<6x32x128xf32, #tpu.memory_space<vmem>>, vector<4x32x128xf32>
    %c0_22 = arith.constant 0 : index
    %c0_23 = arith.constant 0 : index
    %c0_24 = arith.constant 0 : index
    %43 = vector.load %arg4[%c0_22, %c0_23, %c0_24] : memref<4x32x128xf32, #tpu.memory_space<vmem>>, vector<4x32x128xf32>
    %44 = arith.subf %42, %43 : vector<4x32x128xf32>
    %45 = math.absf %44 : vector<4x32x128xf32>
    %cst_25 = arith.constant 1.000000e+00 : f32
    %46 = vector.broadcast %cst_25 : f32 to vector<4x32x128xf32>
    %47 = arith.cmpf olt, %45, %46 : vector<4x32x128xf32>
    %cst_26 = arith.constant 5.000000e-01 : f32
    %48 = vector.broadcast %cst_26 : f32 to vector<4x32x128xf32>
    %49 = arith.mulf %48, %44 : vector<4x32x128xf32>
    %50 = arith.mulf %49, %44 : vector<4x32x128xf32>
    %cst_27 = arith.constant 5.000000e-01 : f32
    %51 = vector.broadcast %cst_27 : f32 to vector<4x32x128xf32>
    %52 = arith.subf %45, %51 : vector<4x32x128xf32>
    %53 = arith.select %47, %50, %52 : vector<4x32x128xi1>, vector<4x32x128xf32>
    %54 = vector.shape_cast %8 : vector<32x128xi1> to vector<1x32x128xi1>
    %cst_28 = arith.constant 0.000000e+00 : f32
    %55 = vector.shape_cast %54 : vector<1x32x128xi1> to vector<1x32x128xi1>
    %56 = vector.broadcast %55 : vector<1x32x128xi1> to vector<4x32x128xi1>
    %57 = vector.broadcast %cst_28 : f32 to vector<4x32x128xf32>
    %58 = arith.select %56, %53, %57 : vector<4x32x128xi1>, vector<4x32x128xf32>
    %c0_29 = arith.constant 0 : index
    %c0_30 = arith.constant 0 : index
    %59 = vector.load %arg8[%c0_29, %c0_30] : memref<8x128xf32, #tpu.memory_space<vmem>>, vector<8x128xf32>
    %60 = vector.shape_cast %58 : vector<4x32x128xf32> to vector<16x8x128xf32>
    %cst_31 = arith.constant dense<0.000000e+00> : vector<8x128xf32>
    %61 = vector.multi_reduction <add>, %60, %cst_31 [0] : vector<16x8x128xf32> to vector<8x128xf32>
    %62 = arith.addf %59, %61 : vector<8x128xf32>
    %c0_32 = arith.constant 0 : index
    %c0_33 = arith.constant 0 : index
    %63 = vector.load %arg8[%c0_32, %c0_33] : memref<8x128xf32, #tpu.memory_space<vmem>>, vector<8x128xf32>
    tpu.vector_store %arg8[%c0_32, %c0_33], %62 {strides = array<i32>} : memref<8x128xf32, #tpu.memory_space<vmem>>, vector<8x128xf32>,
    %c1_i32_34 = arith.constant 1 : i32
    %64 = arith.cmpi eq, %arg1, %c1_i32_34 : i32
    %65 = arith.extui %64 : i1 to i32
    %c0_i32_35 = arith.constant 0 : i32
    %66 = arith.cmpi ne, %65, %c0_i32_35 : i32
    scf.if %66 {
      %c0_36 = arith.constant 0 : index
      %c0_37 = arith.constant 0 : index
      %67 = vector.load %arg6[%c0_36, %c0_37] : memref<8x128xf32, #tpu.memory_space<vmem>>, vector<8x128xf32>
      %c0_38 = arith.constant 0 : index
      %c0_39 = arith.constant 0 : index
      %c0_40 = arith.constant 0 : index
      %c0_41 = arith.constant 0 : index
      %68 = vector.load %arg5[%c0_38, %c0_39, %c0_40, %c0_41] : memref<1x3x8x128xf32, #tpu.memory_space<vmem>>, vector<1x1x8x128xf32>
      %69 = vector.shape_cast %68 : vector<1x1x8x128xf32> to vector<8x128xf32>
      %70 = vector.shape_cast %67 : vector<8x128xf32> to vector<1x1x8x128xf32>
      tpu.vector_store %arg5[%c0_38, %c0_39, %c0_40, %c0_41], %70 {strides = array<i32>} : memref<1x3x8x128xf32, #tpu.memory_space<vmem>>, vector<1x1x8x128xf32>,
      %c0_42 = arith.constant 0 : index
      %c0_43 = arith.constant 0 : index
      %71 = vector.load %arg7[%c0_42, %c0_43] : memref<8x128xf32, #tpu.memory_space<vmem>>, vector<8x128xf32>
      %c0_44 = arith.constant 0 : index
      %c1_45 = arith.constant 1 : index
      %c0_46 = arith.constant 0 : index
      %c0_47 = arith.constant 0 : index
      %72 = vector.load %arg5[%c0_44, %c1_45, %c0_46, %c0_47] : memref<1x3x8x128xf32, #tpu.memory_space<vmem>>, vector<1x1x8x128xf32>
      %73 = vector.shape_cast %72 : vector<1x1x8x128xf32> to vector<8x128xf32>
      %74 = vector.shape_cast %71 : vector<8x128xf32> to vector<1x1x8x128xf32>
      tpu.vector_store %arg5[%c0_44, %c1_45, %c0_46, %c0_47], %74 {strides = array<i32>} : memref<1x3x8x128xf32, #tpu.memory_space<vmem>>, vector<1x1x8x128xf32>,
      %c0_48 = arith.constant 0 : index
      %c0_49 = arith.constant 0 : index
      %75 = vector.load %arg8[%c0_48, %c0_49] : memref<8x128xf32, #tpu.memory_space<vmem>>, vector<8x128xf32>
      %c0_50 = arith.constant 0 : index
      %c2_51 = arith.constant 2 : index
      %c0_52 = arith.constant 0 : index
      %c0_53 = arith.constant 0 : index
      %76 = vector.load %arg5[%c0_50, %c2_51, %c0_52, %c0_53] : memref<1x3x8x128xf32, #tpu.memory_space<vmem>>, vector<1x1x8x128xf32>
      %77 = vector.shape_cast %76 : vector<1x1x8x128xf32> to vector<8x128xf32>
      %78 = vector.shape_cast %75 : vector<8x128xf32> to vector<1x1x8x128xf32>
      tpu.vector_store %arg5[%c0_50, %c2_51, %c0_52, %c0_53], %78 {strides = array<i32>} : memref<1x3x8x128xf32, #tpu.memory_space<vmem>>, vector<1x1x8x128xf32>,
    } else {
    }
    return
  }
  func.func @transform_0(%arg0: i32, %arg1: i32) -> (i32, i32, i32) {
    %c2_i32 = arith.constant 2 : i32
    %0 = arith.muli %arg0, %c2_i32 : i32
    %1 = arith.addi %0, %arg1 : i32
    %c0_i32 = arith.constant 0 : i32
    %c0_i32_0 = arith.constant 0 : i32
    %c0_i32_1 = arith.constant 0 : i32
    return %c0_i32, %1, %c0_i32_0 : i32, i32, i32
  }
  func.func @transform_1(%arg0: i32, %arg1: i32) -> (i32, i32) {
    %c2_i32 = arith.constant 2 : i32
    %0 = arith.muli %arg0, %c2_i32 : i32
    %1 = arith.addi %0, %arg1 : i32
    %c0_i32 = arith.constant 0 : i32
    %c0_i32_0 = arith.constant 0 : i32
    return %1, %c0_i32 : i32, i32
  }
  func.func @transform_2(%arg0: i32, %arg1: i32) -> (i32, i32, i32) {
    %c2_i32 = arith.constant 2 : i32
    %0 = arith.muli %arg0, %c2_i32 : i32
    %1 = arith.addi %0, %arg1 : i32
    %c0_i32 = arith.constant 0 : i32
    %c0_i32_0 = arith.constant 0 : i32
    %c0_i32_1 = arith.constant 0 : i32
    return %c0_i32, %1, %c0_i32_0 : i32, i32, i32
  }
  func.func @transform_3(%arg0: i32, %arg1: i32) -> (i32, i32, i32, i32) {
    %c0_i32 = arith.constant 0 : i32
    %c0_i32_0 = arith.constant 0 : i32
    %c0_i32_1 = arith.constant 0 : i32
    %c0_i32_2 = arith.constant 0 : i32
    return %arg0, %c0_i32, %c0_i32_0, %c0_i32_1 : i32, i32, i32, i32
  }
}

</mosaic_0001>

<llo_original>
// kernel: tpu_custom_call.1
$region0: #{tpu_custom_call.1}
  #allocation0 [shape = 'u32[]', space=smem, size = 0x4, offset = 0x4, fixed_abs, tag = 'smem constant byte address 0x4 - core index']
  #allocation1 [shape = 'u32[72,128]{1,0:T(1,128)}', space=vmem, size = 0x9000, scoped, tag = 'internal scratch']
  #allocation2 [shape = 'f32[8,128]{1,0:T(8,128)}', space=vmem, size = 0x1000, scoped, tag = 'scratch operand']
  #allocation3 [shape = 'f32[8,128]{1,0:T(8,128)}', space=vmem, size = 0x1000, scoped, tag = 'scratch operand']
  #allocation4 [shape = 'f32[8,128]{1,0:T(8,128)}', space=vmem, size = 0x1000, scoped, tag = 'scratch operand']
  #allocation12 [shape = 's32[]', space=sflag, size = 0x4, offset = 0, fixed_abs, tag = 'sflag constant byte address 0x0 - dummy sync flag']
  #allocation14 [shape = 's32[]', space=sflag, size = 0x4, offset = 0, fixed_abs, tag = 'sflag constant byte address 0x0 - dummy sync flag']
  %s0 = inlined_call_operand.hbm [shape: f32[6,128,128], index: 0, kind: input, shape index: {}]
  %s1 = inlined_call_operand.hbm [shape: u8[128,128], index: 1, kind: input, shape index: {}]
  %s2 = inlined_call_operand.hbm [shape: f32[4,128,128], index: 2, kind: input, shape index: {}]
  %s3 = inlined_call_operand.hbm [shape: f32[2,3,8,128], index: 3, kind: output, shape index: {}]
  %s4 = sld [smem:[#allocation0]]
  $region65: #{tpu_custom_call.1} parent=0
    _
  %s6 = ssub.s32 1, %s4
  %s7 = scalar_select 0, %s6, %s4
  $region1: #{tpu_custom_call.1} parent=0
    #allocation5 [shape = 'u8[196608]{0}', space=vmem, size = 0x30000, scoped, tag = 'input window, operand 0']
    #allocation6 [shape = 's32[2]{0}', space=sflag, size = 0x8, scoped, tag = 'scoped memory for tpu_custom_call.1']
    #allocation7 [shape = 's32[2]{0}', space=sflag, size = 0x8, scoped, tag = 'scoped memory for tpu_custom_call.1']
    #allocation8 [shape = 'u8[8192]{0}', space=vmem, size = 0x2000, scoped, tag = 'input window, operand 1']
    #allocation9 [shape = 's32[2]{0}', space=sflag, size = 0x8, scoped, tag = 'scoped memory for tpu_custom_call.1']
    #allocation10 [shape = 'u8[131072]{0}', space=vmem, size = 0x20000, scoped, tag = 'input window, operand 2']
    #allocation11 [shape = 'u8[24576]{0}', space=vmem, size = 0x6000, scoped, tag = 'output window, operand 0']
    %8 = vsyncpa [#allocation6], 0
    %s9 = scalar_lea.sflag [#allocation6], 1
    %10 = vsyncpa %s9, 0
    %11 = vsyncpa [#allocation9], 0
    %s12 = scalar_lea.sflag [#allocation9], 1
    %13 = vsyncpa %s12, 0
    %14 = vsyncpa [#allocation7], 0
    %s15 = scalar_lea.sflag [#allocation7], 1
    %16 = vsyncpa %s15, 0
    loop: start=0, step=1, limit=6
    $region2: #{tpu_custom_call.1} parent=1 // loop_pre_header
      _
    $region3: #{tpu_custom_call.1} parent=1 // loop_header
      %s18 = sphi 0, %s22
      %p19 = scmp.ge.s32.totalorder %s18, 6
      %s25 = sphi 0, %s37
      %s26 = sphi 0, %s33
      %s27 = sphi 0, %s25
      %s28 = sphi 0, %s26
      %s29 = sphi 0, %s27
      %s30 = sphi 0, %s28
      %s44 = sphi 0, %s46
      %s47 = sphi 0, %s44
      %s48 = sphi 0, %s47
      %s64 = sphi 0, %s48
      %s74 = sphi 0, %s76
      %s77 = sphi 0, %s74
      %s78 = sphi 0, %s77
      %s94 = sphi 0, %s78
      %s104 = sphi 0, %s106
      %s107 = sphi 0, %s104
      %s108 = sphi 0, %s107
      %s124 = sphi 0, %s108
      %s130 = sphi 0, %s132
      %s133 = sphi 0, %s130
      %s134 = sphi 0, %s133
      %s150 = sphi 0, %s134
    $region4: #{tpu_custom_call.1} parent=1 // loop_header_branch
      %21 = sbr.rel (%p19) target = $region8
    $region5: #{tpu_custom_call.1} parent=1 // loop_body
      %s23 = ssub.s32 %s18, 1
      %s24 = ssub.s32 %s18, 2
      %s31 = sadd.s32 1, %s26
      %p32 = scmp.ge.s32.totalorder %s31, 2
      %s33 = scalar_select %p32, 0, %s31
      %s34 = sadd.s32 1, %s25
      %s35 = scalar_select %p32, %s34, %s25
      %p36 = scmp.ge.s32.totalorder %s35, 2
      %s37 = scalar_select %p36, 0, %s35
      %s38 = smul.u32 %s25, 2
      %s39 = sadd.s32 %s38, %s26
      %s40 = smul.u32 %s37, 2
      %s41 = sadd.s32 %s40, %s33
      %s42 = ssub.s32 %s39, %s41
      %p43 = scmp.eq.s32.totalorder %s42, 0
      %s45 = sadd.s32 %s44, 1
      %s46 = scalar_select %p43, %s44, %s45
      %p49 = pneg %p43
      %p50 = scmp.eq.s32.totalorder %s18, 3
      %p51 = por %p49, %p50
      %p52 = scmp.ne.s32.totalorder %s44, %s47
      %p53 = scmp.eq.s32.totalorder %s18, 0
      %p54 = por %p52, %p53
      %p55 = scmp.ne.s32.totalorder %s44, %s47
      %p56 = scmp.eq.s32.totalorder %s23, 3
      %p57 = por %p55, %p56
      %p58 = scmp.ne.s32.totalorder %s47, %s48
      %p59 = scmp.eq.s32.totalorder %s23, 0
      %p60 = por %p58, %p59
      %p61 = scmp.ne.s32.totalorder %s47, %s48
      %p62 = scmp.eq.s32.totalorder %s24, 3
      %p63 = por %p61, %p62
      %p65 = scmp.ne.s32.totalorder %s48, %s64
      %p66 = scmp.eq.s32.totalorder %s24, 0
      %p67 = por %p65, %p66
      %s68 = smul.u32 %s25, 2
      %s69 = sadd.s32 %s68, %s26
      %s70 = smul.u32 %s37, 2
      %s71 = sadd.s32 %s70, %s33
      %s72 = ssub.s32 %s69, %s71
      %p73 = scmp.eq.s32.totalorder %s72, 0
      %s75 = sadd.s32 %s74, 1
      %s76 = scalar_select %p73, %s74, %s75
      %p79 = pneg %p73
      %p80 = scmp.eq.s32.totalorder %s18, 3
      %p81 = por %p79, %p80
      %p82 = scmp.ne.s32.totalorder %s74, %s77
      %p83 = scmp.eq.s32.totalorder %s18, 0
      %p84 = por %p82, %p83
      %p85 = scmp.ne.s32.totalorder %s74, %s77
      %p86 = scmp.eq.s32.totalorder %s23, 3
      %p87 = por %p85, %p86
      %p88 = scmp.ne.s32.totalorder %s77, %s78
      %p89 = scmp.eq.s32.totalorder %s23, 0
      %p90 = por %p88, %p89
      %p91 = scmp.ne.s32.totalorder %s77, %s78
      %p92 = scmp.eq.s32.totalorder %s24, 3
      %p93 = por %p91, %p92
      %p95 = scmp.ne.s32.totalorder %s78, %s94
      %p96 = scmp.eq.s32.totalorder %s24, 0
      %p97 = por %p95, %p96
      %s98 = smul.u32 %s25, 2
      %s99 = sadd.s32 %s98, %s26
      %s100 = smul.u32 %s37, 2
      %s101 = sadd.s32 %s100, %s33
      %s102 = ssub.s32 %s99, %s101
      %p103 = scmp.eq.s32.totalorder %s102, 0
      %s105 = sadd.s32 %s104, 1
      %s106 = scalar_select %p103, %s104, %s105
      %p109 = pneg %p103
      %p110 = scmp.eq.s32.totalorder %s18, 3
      %p111 = por %p109, %p110
      %p112 = scmp.ne.s32.totalorder %s104, %s107
      %p113 = scmp.eq.s32.totalorder %s18, 0
      %p114 = por %p112, %p113
      %p115 = scmp.ne.s32.totalorder %s104, %s107
      %p116 = scmp.eq.s32.totalorder %s23, 3
      %p117 = por %p115, %p116
      %p118 = scmp.ne.s32.totalorder %s107, %s108
      %p119 = scmp.eq.s32.totalorder %s23, 0
      %p120 = por %p118, %p119
      %p121 = scmp.ne.s32.totalorder %s107, %s108
      %p122 = scmp.eq.s32.totalorder %s24, 3
      %p123 = por %p121, %p122
      %p125 = scmp.ne.s32.totalorder %s108, %s124
      %p126 = scmp.eq.s32.totalorder %s24, 0
      %p127 = por %p125, %p126
      %s128 = ssub.s32 %s25, %s37
      %p129 = scmp.eq.s32.totalorder %s128, 0
      %s131 = sadd.s32 %s130, 1
      %s132 = scalar_select %p129, %s130, %s131
      %p135 = pneg %p129
      %p136 = scmp.eq.s32.totalorder %s18, 3
      %p137 = por %p135, %p136
      %p138 = scmp.ne.s32.totalorder %s130, %s133
      %p139 = scmp.eq.s32.totalorder %s18, 0
      %p140 = por %p138, %p139
      %p141 = scmp.ne.s32.totalorder %s130, %s133
      %p142 = scmp.eq.s32.totalorder %s23, 3
      %p143 = por %p141, %p142
      %p144 = scmp.ne.s32.totalorder %s133, %s134
      %p145 = scmp.eq.s32.totalorder %s23, 0
      %p146 = por %p144, %p145
      %p147 = scmp.ne.s32.totalorder %s133, %s134
      %p148 = scmp.eq.s32.totalorder %s24, 3
      %p149 = por %p147, %p148
      %p151 = scmp.ne.s32.totalorder %s134, %s150
      %p152 = scmp.eq.s32.totalorder %s24, 0
      %p153 = por %p151, %p152
      %p154 = scmp.le.s32.totalorder 1, %s18
      %p155 = scmp.lt.s32.totalorder %s18, 5
      %p156 = pnand %p154, %p155
      %p157 = pneg %p156
      // Predicated region
      $region9: #{tpu_custom_call.1} parent=5 // pred_check
        _
      $region10: #{tpu_custom_call.1} parent=5 // pred_check_branch
        %159 = sbr.rel (%p156) target = $region12
      $region11: #{tpu_custom_call.1} parent=5 // pred_region
        %s160 = ssub.s32 %s18, 1
      $region12: #{tpu_custom_call.1} parent=5 // pred_fallthru
        _
      %p161 = scmp.lt.s32.totalorder %s18, 4
      // Predicated region
      $region13: #{tpu_custom_call.1} parent=5 // pred_check
        %p162 = pneg %p161
      $region14: #{tpu_custom_call.1} parent=5 // pred_check_branch
        %164 = sbr.rel (%p162) target = $region16
      $region15: #{tpu_custom_call.1} parent=5 // pred_region
        // Predicated region
        $region17: #{tpu_custom_call.1} parent=15 // pred_check
          %p165 = pneg %p54
        $region18: #{tpu_custom_call.1} parent=15 // pred_check_branch
          %167 = sbr.rel (%p165) target = $region20
        $region19: #{tpu_custom_call.1} parent=15 // pred_region
          #allocation13 [shape = 'u32[6]{0}', space=smem, size = 0x18, scoped, tag = 'DMA stride descriptor']
          %s168 = sand.u32 %s44, 1
          %s169 = scalar_lea.sflag [#allocation6], %s168
          %s170 = sand.u32 %s44, 1
          %s171 = smul.addr %s170, 192
          %s172 = scalar_lea.vmem [#allocation5], %s171
          %s173 = smul.u32 %s25, 2
          %s174 = sadd.s32 %s173, %s26
          %s175 = smul.u32 4, %s174
          %177 = vsyncadd %s169, 0
          %s178 = smul.addr %s175, 8
          %s179 = scalar_lea.hbm %s0, %s178
          %s181 = sshll.u32 1, 14
          %s182 = sxor.u32 4294967295, %s181
          %s184 = sld [smem:[#allocation0]]
          %s185 = sadd.s32 2, %s184
          %s187 = sshll.u32 7, 26
          %s188 = sxor.u32 4294967295, %s187
          %s189 = sand.u32 0, %s188
          %s190 = sshll.u32 %s185, 26
          %s191 = sor.u32 %s189, %s190
          %s192 = sshll.u32 %s179, 4
          %s193 = int_to_ptr.hbm [resolvable:$true] %s192
          %s194 = sshll.u32 %s172, 4
          %s195 = int_to_ptr.vmem [resolvable:$true] %s194
          %201 = sst [smem:[#allocation13]] 2048
          %s202 = scalar_lea.smem [#allocation13], 1
          %203 = sst [smem:[%s202]] 512
          %s204 = scalar_lea.smem [#allocation13], 2
          %205 = sst [smem:[%s204]] 4
          %s206 = scalar_lea.smem [#allocation13], 3
          %207 = sst [smem:[%s206]] 128
          %s208 = scalar_lea.smem [#allocation13], 4
          %209 = sst [smem:[%s208]] 128
          %s210 = scalar_lea.smem [#allocation13], 5
          %211 = sst [smem:[%s210]] 8
          %213 = dma.general %s193, 3072, %s195, %s169, [#allocation12], [#allocation13], %s191, 0
        $region20: #{tpu_custom_call.1} parent=15 // pred_fallthru
          _
        // Predicated region
        $region21: #{tpu_custom_call.1} parent=15 // pred_check
          %p214 = pneg %p84
        $region22: #{tpu_custom_call.1} parent=15 // pred_check_branch
          %216 = sbr.rel (%p214) target = $region24
        $region23: #{tpu_custom_call.1} parent=15 // pred_region
          %s217 = sand.u32 %s18, 1
          %s218 = scalar_lea.sflag [#allocation9], %s217
          %s219 = sand.u32 %s74, 1
          %s220 = smul.addr %s219, 8
          %s221 = scalar_lea.vmem [#allocation8], %s220
          %s222 = smul.u32 %s25, 2
          %s223 = sadd.s32 %s222, %s26
          %225 = vsyncadd %s218, 0
          %s226 = smul.addr %s223, 8
          %s227 = scalar_lea.hbm %s1, %s226
          %s229 = sshll.u32 %s227, 4
          %s230 = int_to_ptr.hbm [resolvable:$true] %s229
          %s231 = sshll.u32 %s221, 4
          %s232 = int_to_ptr.vmem [resolvable:$true] %s231
          %234 = dma.hbm_to_vmem [thread:$0]  %s230, 128, %s232, %s218
        $region24: #{tpu_custom_call.1} parent=15 // pred_fallthru
          _
        // Predicated region
        $region25: #{tpu_custom_call.1} parent=15 // pred_check
          %p235 = pneg %p114
        $region26: #{tpu_custom_call.1} parent=15 // pred_check_branch
          %237 = sbr.rel (%p235) target = $region28
        $region27: #{tpu_custom_call.1} parent=15 // pred_region
          #allocation15 [shape = 'u32[6]{0}', space=smem, size = 0x18, scoped, tag = 'DMA stride descriptor']
          %s238 = sand.u32 %s18, 1
          %s239 = scalar_lea.sflag [#allocation9], %s238
          %s240 = sand.u32 %s104, 1
          %s241 = smul.addr %s240, 128
          %s242 = scalar_lea.vmem [#allocation10], %s241
          %s243 = smul.u32 %s25, 2
          %s244 = sadd.s32 %s243, %s26
          %s245 = smul.u32 4, %s244
          %247 = vsyncadd %s239, 0
          %s248 = smul.addr %s245, 8
          %s249 = scalar_lea.hbm %s2, %s248
          %s251 = sshll.u32 1, 14
          %s252 = sxor.u32 4294967295, %s251
          %s254 = sld [smem:[#allocation0]]
          %s255 = sadd.s32 2, %s254
          %s257 = sshll.u32 7, 26
          %s258 = sxor.u32 4294967295, %s257
          %s259 = sand.u32 0, %s258
          %s260 = sshll.u32 %s255, 26
          %s261 = sor.u32 %s259, %s260
          %s262 = sshll.u32 %s249, 4
          %s263 = int_to_ptr.hbm [resolvable:$true] %s262
          %s264 = sshll.u32 %s242, 4
          %s265 = int_to_ptr.vmem [resolvable:$true] %s264
          %271 = sst [smem:[#allocation15]] 2048
          %s272 = scalar_lea.smem [#allocation15], 1
          %273 = sst [smem:[%s272]] 512
          %s274 = scalar_lea.smem [#allocation15], 2
          %275 = sst [smem:[%s274]] 4
          %s276 = scalar_lea.smem [#allocation15], 3
          %277 = sst [smem:[%s276]] 128
          %s278 = scalar_lea.smem [#allocation15], 4
          %279 = sst [smem:[%s278]] 128
          %s280 = scalar_lea.smem [#allocation15], 5
          %281 = sst [smem:[%s280]] 8
          %283 = dma.general %s263, 2048, %s265, %s239, [#allocation14], [#allocation15], %s261, 0
        $region28: #{tpu_custom_call.1} parent=15 // pred_fallthru
          _
      $region16: #{tpu_custom_call.1} parent=5 // pred_fallthru
        _
      %p284 = scmp.le.s32.totalorder 1, %s18
      %p285 = scmp.lt.s32.totalorder %s18, 5
      %p286 = pnand %p284, %p285
      %p287 = pneg %p286
      // Predicated region
      $region29: #{tpu_custom_call.1} parent=5 // pred_check
        _
      $region30: #{tpu_custom_call.1} parent=5 // pred_check_branch
        %289 = sbr.rel (%p286) target = $region32
      $region31: #{tpu_custom_call.1} parent=5 // pred_region
        %s290 = ssub.s32 %s18, 1
        %s291 = sand.u32 %s47, 1
        %s292 = scalar_lea.sflag [#allocation6], %s291
        %s293 = sand.u32 %s47, 1
        %s294 = smul.addr %s293, 192
        %s295 = scalar_lea.vmem [#allocation5], %s294
        // Predicated region
        $region33: #{tpu_custom_call.1} parent=31 // pred_check
          %p296 = pneg %p60
        $region34: #{tpu_custom_call.1} parent=31 // pred_check_branch
          %298 = sbr.rel (%p296) target = $region36
        $region35: #{tpu_custom_call.1} parent=31 // pred_region
          %300 = dma.done %s292, 3072
        $region36: #{tpu_custom_call.1} parent=31 // pred_fallthru
          _
        %s301 = sand.u32 %s23, 1
        %s302 = scalar_lea.sflag [#allocation9], %s301
        %s303 = sand.u32 %s77, 1
        %s304 = smul.addr %s303, 8
        %s305 = scalar_lea.vmem [#allocation8], %s304
        // Predicated region
        $region37: #{tpu_custom_call.1} parent=31 // pred_check
          %p306 = pneg %p90
        $region38: #{tpu_custom_call.1} parent=31 // pred_check_branch
          %308 = sbr.rel (%p306) target = $region40
        $region39: #{tpu_custom_call.1} parent=31 // pred_region
          %310 = dma.done %s302, 128
        $region40: #{tpu_custom_call.1} parent=31 // pred_fallthru
          _
        %s311 = sand.u32 %s23, 1
        %s312 = scalar_lea.sflag [#allocation9], %s311
        %s313 = sand.u32 %s107, 1
        %s314 = smul.addr %s313, 128
        %s315 = scalar_lea.vmem [#allocation10], %s314
        // Predicated region
        $region41: #{tpu_custom_call.1} parent=31 // pred_check
          %p316 = pneg %p120
        $region42: #{tpu_custom_call.1} parent=31 // pred_check_branch
          %318 = sbr.rel (%p316) target = $region44
        $region43: #{tpu_custom_call.1} parent=31 // pred_region
          %320 = dma.done %s312, 2048
        $region44: #{tpu_custom_call.1} parent=31 // pred_fallthru
          _
        %s321 = sand.u32 %s47, 1
        %s322 = scalar_lea.sflag [#allocation6], %s321
        %s323 = sand.u32 %s47, 1
        %s324 = smul.addr %s323, 192
        %s325 = scalar_lea.vmem [#allocation5], %s324
        %p326 = pneg %p60
        %p327 = pneg %p57
        %s328 = sand.u32 %s23, 1
        %s329 = scalar_lea.sflag [#allocation9], %s328
        %s330 = sand.u32 %s77, 1
        %s331 = smul.addr %s330, 8
        %s332 = scalar_lea.vmem [#allocation8], %s331
        %p333 = pneg %p90
        %p334 = pneg %p87
        %s335 = sand.u32 %s23, 1
        %s336 = scalar_lea.sflag [#allocation9], %s335
        %s337 = sand.u32 %s107, 1
        %s338 = smul.addr %s337, 128
        %s339 = scalar_lea.vmem [#allocation10], %s338
        %p340 = pneg %p120
        %p341 = pneg %p117
        %p342 = pneg %p146
        %p343 = pneg %p143
        %s344 = sand.u32 %s133, 1
        %s345 = scalar_lea.sflag [#allocation7], %s344
        %s346 = sand.u32 %s133, 1
        %s347 = smul.addr %s346, 24
        %s348 = scalar_lea.vmem [#allocation11], %s347
        %s349 = smul.u32 %s27, 2
        %s350 = sadd.s32 %s349, %s28
        %s351 = smul.u32 4, %s350
        %s352 = smul.u32 %s27, 2
        %s353 = sadd.s32 %s352, %s28
        %s354 = smul.u32 %s27, 2
        %s355 = sadd.s32 %s354, %s28
        %s356 = smul.u32 4, %s355
        %p357 = scmp.eq.s32.totalorder %s28, 0
        // Predicated region
        $region45: #{tpu_custom_call.1} parent=31 // pred_check
          %p358 = pneg %p357
        $region46: #{tpu_custom_call.1} parent=31 // pred_check_branch
          %360 = sbr.rel (%p358) target = $region48
        $region47: #{tpu_custom_call.1} parent=31 // pred_region
          %361 = vst [vmem:[#allocation2] sm:$0xff] 0.0
          %362 = vst [vmem:[#allocation3] sm:$0xff] 0.0
          %363 = vst [vmem:[#allocation4] sm:$0xff] 0.0
        $region48: #{tpu_custom_call.1} parent=31 // pred_fallthru
          _
        %v364 = vld [vmem:[%s305] sm:$0xff]
        %v365 = vunpack.c.0.s8 %v364
        %v366 = vunpack.c.1.s8 %v364
        %v367 = vunpack.c.2.s8 %v364
        %v368 = vunpack.c.3.s8 %v364
        %v369 = vand.u32 %v365, 255
        %v370 = vand.u32 %v366, 255
        %v371 = vand.u32 %v367, 255
        %v372 = vand.u32 %v368, 255
        %vm373 = vcmp.ne.s32.totalorder %v369, 255
        %vm374 = vcmp.ne.s32.totalorder %v370, 255
        %vm375 = vcmp.ne.s32.totalorder %v371, 255
        %vm376 = vcmp.ne.s32.totalorder %v372, 255
        %vm377 = vcmp.ne.s32.totalorder %v369, 0
        %vm378 = vcmp.ne.s32.totalorder %v370, 0
        %vm379 = vcmp.ne.s32.totalorder %v371, 0
        %vm380 = vcmp.ne.s32.totalorder %v372, 0
        %vm381 = vcmp.eq.s32.totalorder %v369, 1
        %vm382 = vcmp.eq.s32.totalorder %v370, 1
        %vm383 = vcmp.eq.s32.totalorder %v371, 1
        %vm384 = vcmp.eq.s32.totalorder %v372, 1
        %v385 = vsel %vm381, 1, 0
        %v386 = vsel %vm382, 1, 0
        %v387 = vsel %vm383, 1, 0
        %v388 = vsel %vm384, 1, 0
        %v389 = vcvt.s32.f32 %v385
        %v390 = vcvt.s32.f32 %v386
        %v391 = vcvt.s32.f32 %v387
        %v392 = vcvt.s32.f32 %v388
        %v393 = vld [vmem:[%s295] sm:$0xff]
        %v394 = vld [vmem:[%s295 + $0x8] sm:$0xff]
        %v395 = vld [vmem:[%s295 + $0x10] sm:$0xff]
        %v396 = vld [vmem:[%s295 + $0x18] sm:$0xff]
        %s397 = scalar_lea.vmem %s295, 32 [#allocation5]
        %v398 = vld [vmem:[%s397] sm:$0xff]
        %v399 = vld [vmem:[%s397 + $0x8] sm:$0xff]
        %v400 = vld [vmem:[%s397 + $0x10] sm:$0xff]
        %v401 = vld [vmem:[%s397 + $0x18] sm:$0xff]
        %v402 = vsub.f32 %v398, %v393
        %v403 = vsub.f32 %v399, %v394
        %v404 = vsub.f32 %v400, %v395
        %v405 = vsub.f32 %v401, %v396
        %v406 = vmax.f32 %v402, 0.0
        %v407 = vmax.f32 %v403, 0.0
        %v408 = vmax.f32 %v404, 0.0
        %v409 = vmax.f32 %v405, 0.0
        %v410 = vmul.f32 %v389, %v402
        %v411 = vmul.f32 %v390, %v403
        %v412 = vmul.f32 %v391, %v404
        %v413 = vmul.f32 %v392, %v405
        %v414 = vsub.f32 %v406, %v410
        %v415 = vsub.f32 %v407, %v411
        %v416 = vsub.f32 %v408, %v412
        %v417 = vsub.f32 %v409, %v413
        %v418 = vand.u32 2147483647, %v402
        %v419 = vand.u32 2147483647, %v403
        %v420 = vand.u32 2147483647, %v404
        %v421 = vand.u32 2147483647, %v405
        %v422 = vsub.f32 0.0, %v418
        %v423 = vsub.f32 0.0, %v419
        %v424 = vsub.f32 0.0, %v420
        %v425 = vsub.f32 0.0, %v421
        %v426 = vmul.f32 %v422, 1.442695
        %v427 = vpow.pop %v426
        %v428 = vmul.f32 %v423, 1.442695
        %v429 = vpow.pop %v428
        %v430 = vmul.f32 %v424, 1.442695
        %v431 = vpow.pop %v430
        %v432 = vmul.f32 %v425, 1.442695
        %v433 = vpow.pop %v432
        %v434 = vadd.f32 %v427, 1.0
        %v435 = vlog2.pop %v434
        %v436 = vmul.f32 %v435, 0.6931472
        %v437 = vmul.f32 -0.5, %v427
        %v438 = vadd.f32 %v437, 1.0
        %v439 = vmul.f32 %v438, %v427
        %v440 = vand.u32 2147483647, %v427
        %vm441 = vcmp.lt.f32.partialorder %v440, 0.0004427343
        %v442 = vsel %vm441, %v439, %v436
        %v443 = vadd.f32 %v429, 1.0
        %v444 = vlog2.pop %v443
        %v445 = vmul.f32 %v444, 0.6931472
        %v446 = vmul.f32 -0.5, %v429
        %v447 = vadd.f32 %v446, 1.0
        %v448 = vmul.f32 %v447, %v429
        %v449 = vand.u32 2147483647, %v429
        %vm450 = vcmp.lt.f32.partialorder %v449, 0.0004427343
        %v451 = vsel %vm450, %v448, %v445
        %v452 = vadd.f32 %v431, 1.0
        %v453 = vlog2.pop %v452
        %v454 = vmul.f32 %v453, 0.6931472
        %v455 = vmul.f32 -0.5, %v431
        %v456 = vadd.f32 %v455, 1.0
        %v457 = vmul.f32 %v456, %v431
        %v458 = vand.u32 2147483647, %v431
        %vm459 = vcmp.lt.f32.partialorder %v458, 0.0004427343
        %v460 = vsel %vm459, %v457, %v454
        %v461 = vadd.f32 %v433, 1.0
        %v462 = vlog2.pop %v461
        %v463 = vmul.f32 %v462, 0.6931472
        %v464 = vmul.f32 -0.5, %v433
        %v465 = vadd.f32 %v464, 1.0
        %v466 = vmul.f32 %v465, %v433
        %v467 = vand.u32 2147483647, %v433
        %vm468 = vcmp.lt.f32.partialorder %v467, 0.0004427343
        %v469 = vsel %vm468, %v466, %v463
        %v470 = vadd.f32 %v414, %v442
        %v471 = vadd.f32 %v415, %v451
        %v472 = vadd.f32 %v416, %v460
        %v473 = vadd.f32 %v417, %v469
        %v474 = vsel %vm373, %v470, 0.0
        %v475 = vsel %vm374, %v471, 0.0
        %v476 = vsel %vm375, %v472, 0.0
        %v477 = vsel %vm376, %v473, 0.0
        %v478 = vld [vmem:[#allocation2] sm:$0xff]
        %v479 = vadd.f32 %v474, %v475
        %v480 = vadd.f32 %v479, %v476
        %v481 = vadd.f32 %v480, %v477
        %v482 = vadd.f32 %v478, %v481
        %483 = vst [vmem:[#allocation2] sm:$0xff] %v482
        %v484 = vld [vmem:[#allocation3] sm:$0xff]
        %v485 = vsel %vm373, 1, 0
        %v486 = vsel %vm374, 1, 0
        %v487 = vsel %vm375, 1, 0
        %v488 = vsel %vm376, 1, 0
        %v489 = vcvt.s32.f32 %v485
        %v490 = vcvt.s32.f32 %v486
        %v491 = vcvt.s32.f32 %v487
        %v492 = vcvt.s32.f32 %v488
        %v493 = vadd.f32 %v489, %v490
        %v494 = vadd.f32 %v493, %v491
        %v495 = vadd.f32 %v494, %v492
        %v496 = vadd.f32 %v484, %v495
        %497 = vst [vmem:[#allocation3] sm:$0xff] %v496
        %s498 = scalar_lea.vmem %s295, 64 [#allocation5]
        %v499 = vld [vmem:[%s498] sm:$0xff]
        %v500 = vld [vmem:[%s498 + $0x8] sm:$0xff]
        %v501 = vld [vmem:[%s498 + $0x10] sm:$0xff]
        %v502 = vld [vmem:[%s498 + $0x18] sm:$0xff]
        %v503 = vld [vmem:[%s498 + $0x20] sm:$0xff]
        %v504 = vld [vmem:[%s498 + $0x28] sm:$0xff]
        %v505 = vld [vmem:[%s498 + $0x30] sm:$0xff]
        %v506 = vld [vmem:[%s498 + $0x38] sm:$0xff]
        %v507 = vld [vmem:[%s498 + $0x40] sm:$0xff]
        %v508 = vld [vmem:[%s498 + $0x48] sm:$0xff]
        %v509 = vld [vmem:[%s498 + $0x50] sm:$0xff]
        %v510 = vld [vmem:[%s498 + $0x58] sm:$0xff]
        %v511 = vld [vmem:[%s498 + $0x60] sm:$0xff]
        %v512 = vld [vmem:[%s498 + $0x68] sm:$0xff]
        %v513 = vld [vmem:[%s498 + $0x70] sm:$0xff]
        %v514 = vld [vmem:[%s498 + $0x78] sm:$0xff]
        %v515 = vld [vmem:[%s315] sm:$0xff]
        %v516 = vld [vmem:[%s315 + $0x8] sm:$0xff]
        %v517 = vld [vmem:[%s315 + $0x10] sm:$0xff]
        %v518 = vld [vmem:[%s315 + $0x18] sm:$0xff]
        %v519 = vld [vmem:[%s315 + $0x20] sm:$0xff]
        %v520 = vld [vmem:[%s315 + $0x28] sm:$0xff]
        %v521 = vld [vmem:[%s315 + $0x30] sm:$0xff]
        %v522 = vld [vmem:[%s315 + $0x38] sm:$0xff]
        %v523 = vld [vmem:[%s315 + $0x40] sm:$0xff]
        %v524 = vld [vmem:[%s315 + $0x48] sm:$0xff]
        %v525 = vld [vmem:[%s315 + $0x50] sm:$0xff]
        %v526 = vld [vmem:[%s315 + $0x58] sm:$0xff]
        %v527 = vld [vmem:[%s315 + $0x60] sm:$0xff]
        %v528 = vld [vmem:[%s315 + $0x68] sm:$0xff]
        %v529 = vld [vmem:[%s315 + $0x70] sm:$0xff]
        %v530 = vld [vmem:[%s315 + $0x78] sm:$0xff]
        %v531 = vsub.f32 %v499, %v515
        %v532 = vsub.f32 %v500, %v516
        %v533 = vsub.f32 %v501, %v517
        %v534 = vsub.f32 %v502, %v518
        %v535 = vsub.f32 %v503, %v519
        %v536 = vsub.f32 %v504, %v520
        %v537 = vsub.f32 %v505, %v521
        %v538 = vsub.f32 %v506, %v522
        %v539 = vsub.f32 %v507, %v523
        %v540 = vsub.f32 %v508, %v524
        %v541 = vsub.f32 %v509, %v525
        %v542 = vsub.f32 %v510, %v526
        %v543 = vsub.f32 %v511, %v527
        %v544 = vsub.f32 %v512, %v528
        %v545 = vsub.f32 %v513, %v529
        %v546 = vsub.f32 %v514, %v530
        %v547 = vand.u32 2147483647, %v531
        %v548 = vand.u32 2147483647, %v532
        %v549 = vand.u32 2147483647, %v533
        %v550 = vand.u32 2147483647, %v534
        %v551 = vand.u32 2147483647, %v535
        %v552 = vand.u32 2147483647, %v536
        %v553 = vand.u32 2147483647, %v537
        %v554 = vand.u32 2147483647, %v538
        %v555 = vand.u32 2147483647, %v539
        %v556 = vand.u32 2147483647, %v540
        %v557 = vand.u32 2147483647, %v541
        %v558 = vand.u32 2147483647, %v542
        %v559 = vand.u32 2147483647, %v543
        %v560 = vand.u32 2147483647, %v544
        %v561 = vand.u32 2147483647, %v545
        %v562 = vand.u32 2147483647, %v546
        %vm563 = vcmp.lt.f32.partialorder %v547, 1.0
        %vm564 = vcmp.lt.f32.partialorder %v548, 1.0
        %vm565 = vcmp.lt.f32.partialorder %v549, 1.0
        %vm566 = vcmp.lt.f32.partialorder %v550, 1.0
        %vm567 = vcmp.lt.f32.partialorder %v551, 1.0
        %vm568 = vcmp.lt.f32.partialorder %v552, 1.0
        %vm569 = vcmp.lt.f32.partialorder %v553, 1.0
        %vm570 = vcmp.lt.f32.partialorder %v554, 1.0
        %vm571 = vcmp.lt.f32.partialorder %v555, 1.0
        %vm572 = vcmp.lt.f32.partialorder %v556, 1.0
        %vm573 = vcmp.lt.f32.partialorder %v557, 1.0
        %vm574 = vcmp.lt.f32.partialorder %v558, 1.0
        %vm575 = vcmp.lt.f32.partialorder %v559, 1.0
        %vm576 = vcmp.lt.f32.partialorder %v560, 1.0
        %vm577 = vcmp.lt.f32.partialorder %v561, 1.0
        %vm578 = vcmp.lt.f32.partialorder %v562, 1.0
        %v579 = vmul.f32 %v531, 0.5
        %v580 = vmul.f32 %v532, 0.5
        %v581 = vmul.f32 %v533, 0.5
        %v582 = vmul.f32 %v534, 0.5
        %v583 = vmul.f32 %v535, 0.5
        %v584 = vmul.f32 %v536, 0.5
        %v585 = vmul.f32 %v537, 0.5
        %v586 = vmul.f32 %v538, 0.5
        %v587 = vmul.f32 %v539, 0.5
        %v588 = vmul.f32 %v540, 0.5
        %v589 = vmul.f32 %v541, 0.5
        %v590 = vmul.f32 %v542, 0.5
        %v591 = vmul.f32 %v543, 0.5
        %v592 = vmul.f32 %v544, 0.5
        %v593 = vmul.f32 %v545, 0.5
        %v594 = vmul.f32 %v546, 0.5
        %v595 = vmul.f32 %v579, %v531
        %v596 = vmul.f32 %v580, %v532
        %v597 = vmul.f32 %v581, %v533
        %v598 = vmul.f32 %v582, %v534
        %v599 = vmul.f32 %v583, %v535
        %v600 = vmul.f32 %v584, %v536
        %v601 = vmul.f32 %v585, %v537
        %v602 = vmul.f32 %v586, %v538
        %v603 = vmul.f32 %v587, %v539
        %v604 = vmul.f32 %v588, %v540
        %v605 = vmul.f32 %v589, %v541
        %v606 = vmul.f32 %v590, %v542
        %v607 = vmul.f32 %v591, %v543
        %v608 = vmul.f32 %v592, %v544
        %v609 = vmul.f32 %v593, %v545
        %v610 = vmul.f32 %v594, %v546
        %v611 = vsub.f32 %v547, 0.5
        %v612 = vsub.f32 %v548, 0.5
        %v613 = vsub.f32 %v549, 0.5
        %v614 = vsub.f32 %v550, 0.5
        %v615 = vsub.f32 %v551, 0.5
        %v616 = vsub.f32 %v552, 0.5
        %v617 = vsub.f32 %v553, 0.5
        %v618 = vsub.f32 %v554, 0.5
        %v619 = vsub.f32 %v555, 0.5
        %v620 = vsub.f32 %v556, 0.5
        %v621 = vsub.f32 %v557, 0.5
        %v622 = vsub.f32 %v558, 0.5
        %v623 = vsub.f32 %v559, 0.5
        %v624 = vsub.f32 %v560, 0.5
        %v625 = vsub.f32 %v561, 0.5
        %v626 = vsub.f32 %v562, 0.5
        %v627 = vsel %vm563, %v595, %v611
        %v628 = vsel %vm564, %v596, %v612
        %v629 = vsel %vm565, %v597, %v613
        %v630 = vsel %vm566, %v598, %v614
        %v631 = vsel %vm567, %v599, %v615
        %v632 = vsel %vm568, %v600, %v616
        %v633 = vsel %vm569, %v601, %v617
        %v634 = vsel %vm570, %v602, %v618
        %v635 = vsel %vm571, %v603, %v619
        %v636 = vsel %vm572, %v604, %v620
        %v637 = vsel %vm573, %v605, %v621
        %v638 = vsel %vm574, %v606, %v622
        %v639 = vsel %vm575, %v607, %v623
        %v640 = vsel %vm576, %v608, %v624
        %v641 = vsel %vm577, %v609, %v625
        %v642 = vsel %vm578, %v610, %v626
        %v643 = vsel %vm377, 1, 0
        %v644 = vsel %vm378, 1, 0
        %v645 = vsel %vm379, 1, 0
        %v646 = vsel %vm380, 1, 0
        %vm647 = vcmp.eq.s32.totalorder %v643, 1
        %vm648 = vcmp.eq.s32.totalorder %v644, 1
        %vm649 = vcmp.eq.s32.totalorder %v645, 1
        %vm650 = vcmp.eq.s32.totalorder %v646, 1
        %v651 = vsel %vm647, %v627, 0.0
        %v652 = vsel %vm648, %v628, 0.0
        %v653 = vsel %vm649, %v629, 0.0
        %v654 = vsel %vm650, %v630, 0.0
        %v655 = vsel %vm647, %v631, 0.0
        %v656 = vsel %vm648, %v632, 0.0
        %v657 = vsel %vm649, %v633, 0.0
        %v658 = vsel %vm650, %v634, 0.0
        %v659 = vsel %vm647, %v635, 0.0
        %v660 = vsel %vm648, %v636, 0.0
        %v661 = vsel %vm649, %v637, 0.0
        %v662 = vsel %vm650, %v638, 0.0
        %v663 = vsel %vm647, %v639, 0.0
        %v664 = vsel %vm648, %v640, 0.0
        %v665 = vsel %vm649, %v641, 0.0
        %v666 = vsel %vm650, %v642, 0.0
        %v667 = vld [vmem:[#allocation4] sm:$0xff]
        %v668 = vadd.f32 %v651, %v652
        %v669 = vadd.f32 %v668, %v653
        %v670 = vadd.f32 %v669, %v654
        %v671 = vadd.f32 %v670, %v655
        %v672 = vadd.f32 %v671, %v656
        %v673 = vadd.f32 %v672, %v657
        %v674 = vadd.f32 %v673, %v658
        %v675 = vadd.f32 %v674, %v659
        %v676 = vadd.f32 %v675, %v660
        %v677 = vadd.f32 %v676, %v661
        %v678 = vadd.f32 %v677, %v662
        %v679 = vadd.f32 %v678, %v663
        %v680 = vadd.f32 %v679, %v664
        %v681 = vadd.f32 %v680, %v665
        %v682 = vadd.f32 %v681, %v666
        %v683 = vadd.f32 %v667, %v682
        %684 = vst [vmem:[#allocation4] sm:$0xff] %v683
        %p685 = scmp.eq.s32.totalorder %s28, 1
        // Predicated region
        $region49: #{tpu_custom_call.1} parent=31 // pred_check
          %p686 = pneg %p685
        $region50: #{tpu_custom_call.1} parent=31 // pred_check_branch
          %688 = sbr.rel (%p686) target = $region52
        $region51: #{tpu_custom_call.1} parent=31 // pred_region
          %v689 = vld [vmem:[#allocation2] sm:$0xff]
          %690 = vst [vmem:[%s348] sm:$0xff] %v689
          %v691 = vld [vmem:[#allocation3] sm:$0xff]
          %s692 = scalar_lea.vmem %s348, 8 [#allocation11]
          %693 = vst [vmem:[%s692] sm:$0xff] %v691
          %v694 = vld [vmem:[#allocation4] sm:$0xff]
          %s695 = scalar_lea.vmem %s348, 16 [#allocation11]
          %696 = vst [vmem:[%s695] sm:$0xff] %v694
        $region52: #{tpu_custom_call.1} parent=31 // pred_fallthru
          _
        %s697 = sand.u32 %s133, 1
        %s698 = scalar_lea.sflag [#allocation7], %s697
        %s699 = sand.u32 %s133, 1
        %s700 = smul.addr %s699, 24
        %s701 = scalar_lea.vmem [#allocation11], %s700
        // Predicated region
        $region53: #{tpu_custom_call.1} parent=31 // pred_check
          %p702 = pneg %p143
        $region54: #{tpu_custom_call.1} parent=31 // pred_check_branch
          %704 = sbr.rel (%p702) target = $region56
        $region55: #{tpu_custom_call.1} parent=31 // pred_region
          %706 = vsyncadd %s698, 0
          %s707 = smul.addr %s27, 3
          %s708 = smul.addr %s707, 8
          %s709 = scalar_lea.hbm %s3, %s708
          %s710 = sshll.u32 %s701, 4
          %s711 = int_to_ptr.vmem [resolvable:$true] %s710
          %s712 = sshll.u32 %s709, 4
          %s713 = int_to_ptr.hbm [resolvable:$true] %s712
          %718 = dma.vmem_to_hbm [thread:$0]  %s711, 384, %s713, %s698, 128, 128, 8
        $region56: #{tpu_custom_call.1} parent=31 // pred_fallthru
          _
      $region32: #{tpu_custom_call.1} parent=5 // pred_fallthru
        _
      %p719 = scmp.le.s32.totalorder 2, %s18
      // Predicated region
      $region57: #{tpu_custom_call.1} parent=5 // pred_check
        %p720 = pneg %p719
      $region58: #{tpu_custom_call.1} parent=5 // pred_check_branch
        %722 = sbr.rel (%p720) target = $region60
      $region59: #{tpu_custom_call.1} parent=5 // pred_region
        %s723 = ssub.s32 %s18, 2
        // Predicated region
        $region61: #{tpu_custom_call.1} parent=59 // pred_check
          %p724 = pneg %p149
        $region62: #{tpu_custom_call.1} parent=59 // pred_check_branch
          %726 = sbr.rel (%p724) target = $region64
        $region63: #{tpu_custom_call.1} parent=59 // pred_region
          %s727 = sand.u32 %s134, 1
          %s728 = scalar_lea.sflag [#allocation7], %s727
          %s729 = sand.u32 %s134, 1
          %s730 = smul.addr %s729, 24
          %s731 = scalar_lea.vmem [#allocation11], %s730
          %733 = dma.done %s728, 384
        $region64: #{tpu_custom_call.1} parent=59 // pred_fallthru
          _
      $region60: #{tpu_custom_call.1} parent=5 // pred_fallthru
        _
    $region6: #{tpu_custom_call.1} parent=1 // loop_footer
      %s22 = sadd.s32 1, %s18
    $region7: #{tpu_custom_call.1} parent=1 // loop_footer_branch
      %17 = sbr.rel target = $region3
    $region8: #{tpu_custom_call.1} parent=1 // loop_exit
      _
    %734 = vsyncpa [#allocation6], 1
    %s735 = scalar_lea.sflag [#allocation6], 1
    %736 = vsyncpa %s735, 1
    %737 = vsyncpa [#allocation9], 1
    %s738 = scalar_lea.sflag [#allocation9], 1
    %739 = vsyncpa %s738, 1
    %740 = vsyncpa [#allocation7], 1
    %s741 = scalar_lea.sflag [#allocation7], 1
    %742 = vsyncpa %s741, 1

</llo_original>
